<compile_context>
chip_gen: v7x
topology: tpu7x:2x2x1
jax: 0.10.0
libtpu: 0.0.40
codegen_flags: <defaults>
</compile_context>

<pallas_src>
import functools

import jax
import jax.numpy as jnp
from jax.experimental import pallas as pl
from jax.experimental.pallas import tpu as pltpu


def _conv_tile(ctr_ref, top_ref, bot_ref, bzf_ref, *, K, dilation, th, p):
    """Bias-free KxK conv of conv1x1(x) for one (th, W*Cout) tile.

    ctr_ref: (th, Wp*Cin) tile of the W-padded input (compute dtype).
    top_ref/bot_ref: (p, Wp*Cin) halo rows above / below the tile.
    bzf_ref: (K*Wp*Cin, W*Cout) banded fused weight (compute dtype).
    Returns z: (th, W*Cout) f32.
    """
    f32 = jnp.float32
    ctr = ctr_ref[...].astype(f32)
    if p > 0:
        slab = jnp.concatenate(
            [top_ref[...].astype(f32), ctr, bot_ref[...].astype(f32)], axis=0)
    else:
        slab = ctr                                    # K == 1: no halo rows needed
    # im2row patch: one deep contraction (K*Wp*Cin) instead of K accumulated matmuls.
    patch = jnp.concatenate(
        [slab[kh * dilation: kh * dilation + th, :] for kh in range(K)], axis=1)
    return jnp.dot(patch.astype(bzf_ref.dtype), bzf_ref[...],
                   preferred_element_type=f32)


def _stats_kernel(ctr_ref, top_ref, bot_ref, bzf_ref, stats_ref, *, K, dilation, th, p):
    """Pass 1: per-tile partial sums of z and z^2 (training-mode batch statistics)."""
    wc = stats_ref.shape[-1]
    z = _conv_tile(ctr_ref, top_ref, bot_ref, bzf_ref, K=K, dilation=dilation, th=th, p=p)
    # 8-row block written with a single unmasked store (rows 2..7 are padding).
    stats_ref[...] = jnp.concatenate(
        [jnp.sum(z, axis=0, keepdims=True),
         jnp.sum(z * z, axis=0, keepdims=True),
         jnp.zeros((6, wc), jnp.float32)], axis=0)


def _apply_kernel(ctr_ref, top_ref, bot_ref, bzf_ref, b1w_ref, b1t_ref,
                  scale_ref, shift_ref, out_ref, *, K, dilation, th, p):
    """Pass 2: recompute conv, apply BN (folded scale/shift) + ReLU + conv1x1 residual."""
    z = _conv_tile(ctr_ref, top_ref, bot_ref, bzf_ref, K=K, dilation=dilation, th=th, p=p)
    y = jnp.dot(ctr_ref[...], b1w_ref[...],
                preferred_element_type=jnp.float32) + b1t_ref[...]
    act = jnp.maximum(z * scale_ref[...] + shift_ref[...], 0.0)
    out_ref[...] = (act + y).astype(out_ref.dtype)


def _tile_vmem_bytes(th, *, wpc, wc, K, p, ex):
    """Per-grid-step resident VMEM estimate (streamed operands x2, constants x1, live values)."""
    ph = max(p, 1)
    return (2 * th * wpc * ex            # x center tile, double-buffered
            + 4 * ph * wpc * ex          # top + bottom halos, double-buffered
            + (K + 1) * wpc * wc * ex    # fused + residual weights, Buffered(1)
            + 3 * wc * 4                 # bias / scale / shift rows
            + 2 * th * wc * 4            # output tile, double-buffered
            + (th + 2 * p) * wpc * 4     # f32 slab value
            + th * (K * wpc) * (4 + ex)  # im2row patch (f32 + cast copy)
            + 3 * th * wc * 4)           # z / act / y values


def _pick_tile_h(H, N, *, wpc, wc, K, p, ex, max_tile_h, budget):
    """Largest H-tile that divides H, is a multiple of 8 (or == H), and fits the budget."""
    divs = [d for d in range(H, 0, -1) if H % d == 0 and (d % 8 == 0 or d == H)]
    ok = [d for d in divs
          if d <= max_tile_h
          and _tile_vmem_bytes(d, wpc=wpc, wc=wc, K=K, p=p, ex=ex) <= budget]
    if N == 1:  # keep >= 2 parallel programs so both v7x TensorCores stay busy
        multi = [d for d in ok if H // d >= 2]
        ok = multi or ok
    return ok[0] if ok else divs[-1]


def resblock_forward(x_nchw, w1, b1, w3, b3, gamma, beta, *,
                     kernel_size, dilation=1, eps=1e-5,
                     compute_dtype=jnp.bfloat16, max_tile_h=256,
                     vmem_budget_bytes=24 << 20):
    """x_nchw: (N, Cin, H, W).  Returns (N, Cout, H, W).  b3 (and b1 via w3) cancel inside BN."""
    del b3
    N, Cin, H, W = x_nchw.shape
    Cout = w1.shape[1]
    K = kernel_size
    assert K % 2 == 1, "even kernel sizes break the residual add in the reference module"
    p = ((K - 1) // 2) * dilation
    assert p < H and p < W, "reflect padding requires pad < spatial extent"
    Wp = W + 2 * p
    wpc = Wp * Cin
    wc = W * Cout
    f32 = jnp.float32
    ex = jnp.dtype(compute_dtype).itemsize

    th = _pick_tile_h(H, N, wpc=wpc, wc=wc, K=K, p=p, ex=ex,
                      max_tile_h=max_tile_h, budget=vmem_budget_bytes)
    nt = H // th
    ph = max(p, 1)

    # ------------- layout plumbing (plain XLA, outside the kernels) -------------
    # One fused transpose+pad+cast pass; only W is reflect-padded so the kernels can read
    # non-overlapping (th, Wp*Cin) row tiles straight from this array (no halo duplication).
    x_nhwc = jnp.transpose(x_nchw, (0, 2, 3, 1))
    x_ctr = jnp.pad(x_nhwc, ((0, 0), (0, 0), (p, p), (0, 0)),
                    mode="reflect").reshape(N, H, wpc).astype(compute_dtype)
    if p > 0:
        # Tiny (N, nt, p, Wp*Cin) halo arrays: p rows above / below each tile, with the
        # H-boundary reflection folded into the gather indices.
        top_ids = jnp.abs(jnp.arange(nt)[:, None] * th + jnp.arange(-p, 0)[None, :])
        bot_raw = jnp.arange(nt)[:, None] * th + th + jnp.arange(p)[None, :]
        bot_ids = (H - 1) - jnp.abs((H - 1) - bot_raw)
        x_top = x_ctr[:, top_ids.reshape(-1), :].reshape(N, nt, p, wpc)
        x_bot = x_ctr[:, bot_ids.reshape(-1), :].reshape(N, nt, p, wpc)
    else:
        x_top = jnp.zeros((N, nt, ph, wpc), compute_dtype)   # unused when p == 0
        x_bot = jnp.zeros((N, nt, ph, wpc), compute_dtype)

    # Fold conv1x1 into the KxK conv: w3f[kh,kw,ci,co] = sum_cm w1[ci,cm] * w3[kh,kw,cm,co],
    # then build the banded (Toeplitz-along-W) weight, fused over kh for one deep matmul.
    w3f = jnp.einsum("im,hkmo->hkio", w1.astype(f32), w3.astype(f32))
    sel = (jnp.arange(Wp)[:, None, None]
           == jnp.arange(W)[None, :, None] + dilation * jnp.arange(K)[None, None, :]
           ).astype(f32)                                      # (Wp, W, K)
    bzf = jnp.einsum("awk,hkio->haiwo", sel, w3f).reshape(K * wpc, wc).astype(compute_dtype)
    sel1 = (jnp.arange(Wp)[:, None] == jnp.arange(W)[None, :] + p).astype(f32)
    b1w = jnp.einsum("aw,io->aiwo", sel1, w1.astype(f32)).reshape(wpc, wc).astype(compute_dtype)
    b1t = jnp.tile(b1.reshape(Cout).astype(f32), W).reshape(1, wc)

    const = pl.Buffered(1)   # grid-invariant operands: fetched once, no double-buffering
    x_spec = pl.BlockSpec((None, th, wpc), lambda n, t: (n, t, 0))
    halo_spec = pl.BlockSpec((None, None, ph, wpc), lambda n, t: (n, t, 0, 0))
    bzf_spec = pl.BlockSpec((K * wpc, wc), lambda n, t: (0, 0), pipeline_mode=const)
    b1w_spec = pl.BlockSpec((wpc, wc), lambda n, t: (0, 0), pipeline_mode=const)
    vec_spec = pl.BlockSpec((1, wc), lambda n, t: (0, 0), pipeline_mode=const)

    est = _tile_vmem_bytes(th, wpc=wpc, wc=wc, K=K, p=p, ex=ex)
    cparams = pltpu.CompilerParams(
        dimension_semantics=("parallel", "parallel"),
        vmem_limit_bytes=int(min(48 << 20, max(2 * est, 8 << 20))))
    conv_flops = 2 * N * H * (K * wpc) * wc
    x_bytes = (x_ctr.size + x_top.size + x_bot.size) * ex

    # ------------------------- pass 1: batch statistics -------------------------
    stats = pl.pallas_call(
        functools.partial(_stats_kernel, K=K, dilation=dilation, th=th, p=p),
        out_shape=jax.ShapeDtypeStruct((N, nt, 8, wc), f32),
        grid=(N, nt),
        in_specs=[x_spec, halo_spec, halo_spec, bzf_spec],
        out_specs=pl.BlockSpec((None, None, 8, wc), lambda n, t: (n, t, 0, 0)),
        compiler_params=cparams,
        cost_estimate=pl.CostEstimate(
            flops=conv_flops, transcendentals=0,
            bytes_accessed=x_bytes + bzf.size * ex + N * nt * 8 * wc * 4),
    )(x_ctr, x_top, x_bot, bzf)

    # Tiny per-channel reductions + BN affine folding in plain JAX (f32).
    # TODO(synk): E[z^2]-E[z]^2 is fine here (biases dropped => small mean); switch to a
    #             compensated two-pass variance if tolerances ever tighten.
    tot = jnp.sum(stats[:, :, :2, :], axis=(0, 1)).reshape(2, W, Cout).sum(axis=1)
    cnt = f32(N * H * W)
    mean = tot[0] / cnt
    var = jnp.maximum(tot[1] / cnt - mean * mean, 0.0)   # biased variance, like torch BN(train)
    scale = gamma.reshape(Cout).astype(f32) * jax.lax.rsqrt(var + eps)
    shift = beta.reshape(Cout).astype(f32) - mean * scale
    scale_t = jnp.tile(scale, W).reshape(1, wc)          # lane-dense per-(w,c) rows
    shift_t = jnp.tile(shift, W).reshape(1, wc)

    # ------------- pass 2: conv + BN + ReLU + residual, lane-dense store -------------
    out = pl.pallas_call(
        functools.partial(_apply_kernel, K=K, dilation=dilation, th=th, p=p),
        out_shape=jax.ShapeDtypeStruct((N, H, wc), x_nchw.dtype),
        grid=(N, nt),
        in_specs=[x_spec, halo_spec, halo_spec, bzf_spec, b1w_spec,
                  vec_spec, vec_spec, vec_spec],
        out_specs=pl.BlockSpec((None, th, wc), lambda n, t: (n, t, 0)),
        compiler_params=cparams,
        cost_estimate=pl.CostEstimate(
            flops=conv_flops + 2 * N * H * wpc * wc, transcendentals=0,
            bytes_accessed=(x_bytes + (bzf.size + b1w.size) * ex + 3 * wc * 4
                            + N * H * wc * x_nchw.dtype.itemsize)),
    )(x_ctr, x_top, x_bot, bzf, b1w, b1t, scale_t, shift_t)

    out = out.reshape(N, H, W, Cout)          # lanes (w*Cout + c) -> (W, C)
    return jnp.transpose(out, (0, 3, 1, 2))   # NHWC -> NCHW


def _reference(x_nchw, w1, b1, w3, b3, gamma, beta, *, kernel_size, dilation=1, eps=1e-5):
    """Pure-JAX reference of the PyTorch ResBlock.forward (training-mode BN)."""
    K = kernel_size
    p = ((K - 1) // 2) * dilation
    C_in, C_out = w1.shape
    x = jnp.transpose(x_nchw, (0, 2, 3, 1))
    y = jax.lax.conv_general_dilated(
        x, w1.reshape(1, 1, C_in, C_out), (1, 1), "VALID",
        dimension_numbers=("NHWC", "HWIO", "NHWC")) + b1.reshape(C_out)
    yp = jnp.pad(y, ((0, 0), (p, p), (p, p), (0, 0)), mode="reflect")
    z = jax.lax.conv_general_dilated(
        yp, w3, (1, 1), "VALID", rhs_dilation=(dilation, dilation),
        dimension_numbers=("NHWC", "HWIO", "NHWC")) + b3.reshape(C_out)
    mean = jnp.mean(z, axis=(0, 1, 2))
    var = jnp.mean((z - mean) ** 2, axis=(0, 1, 2))
    act = jnp.maximum((z - mean) / jnp.sqrt(var + eps) * gamma.reshape(C_out)
                      + beta.reshape(C_out), 0.0)
    return jnp.transpose(act + y, (0, 3, 1, 2))


if __name__ == "__main__":
    N, C_in, C_out, H, W, K = 2, 4, 8, 16, 16, 3

    key = jax.random.PRNGKey(0)
    ks = jax.random.split(key, 7)
    x = jax.random.normal(ks[0], (N, C_in, H, W), jnp.float32)

    # Deterministic synthetic parameters (shapes per the nn.Module __init__).
    w1 = 0.5 * jax.random.normal(ks[1], (C_in, C_out), jnp.float32)         # conv1x1.weight (Cin, Cout)
    b1 = 0.1 * jax.random.normal(ks[2], (1, C_out), jnp.float32)            # conv1x1.bias
    w3 = 0.2 * jax.random.normal(ks[3], (K, K, C_out, C_out), jnp.float32)  # op.weight (HWIO)
    b3 = 0.1 * jax.random.normal(ks[4], (1, C_out), jnp.float32)            # op.bias
    gamma = 1.0 + 0.1 * jax.random.normal(ks[5], (1, C_out), jnp.float32)   # bn.weight
    beta = 0.1 * jax.random.normal(ks[6], (1, C_out), jnp.float32)          # bn.bias

    ref = jax.block_until_ready(
        _reference(x, w1, b1, w3, b3, gamma, beta, kernel_size=K))

    # Exact-precision path (f32 MXU operands) — strict correctness check.
    out_f32 = jax.block_until_ready(
        resblock_forward(x, w1, b1, w3, b3, gamma, beta, kernel_size=K,
                         compute_dtype=jnp.float32))
    assert out_f32.shape == (N, C_out, H, W), out_f32.shape
    err_f32 = float(jnp.max(jnp.abs(out_f32 - ref)))
    assert err_f32 < 1e-3, err_f32

    # Fast path (default): bf16 MXU operands, f32 accumulation.
    out_bf16 = jax.block_until_ready(
        resblock_forward(x, w1, b1, w3, b3, gamma, beta, kernel_size=K))
    assert out_bf16.shape == (N, C_out, H, W), out_bf16.shape
    err_bf16 = float(jnp.max(jnp.abs(out_bf16 - ref)))
    assert err_bf16 < 1e-1, err_bf16

    print("KERNEL_OK")
</pallas_src>

<mosaic_0001>
module attributes {stable_mosaic.version = 11 : i64} {
  func.func @_stats_kernel(%arg0: i32, %arg1: i32, %arg2: memref<1x16x72xf32, #tpu.memory_space<vmem>>, %arg3: memref<1x1x1x72xf32, #tpu.memory_space<vmem>>, %arg4: memref<1x1x1x72xf32, #tpu.memory_space<vmem>>, %arg5: memref<216x128xf32, #tpu.memory_space<vmem>>, %arg6: memref<1x1x8x128xf32, #tpu.memory_space<vmem>>) attributes {dimension_semantics = [#tpu.dimension_semantics<parallel>, #tpu.dimension_semantics<parallel>], iteration_bounds = array<i64: 2, 1>, scalar_prefetch = 0 : i64, scratch_operands = 0 : i64, tpu.core_type = #tpu.core_type<tc>, window_params = [{transform_indices = @transform_0, window_bounds = array<i64: 1, 16, 72>}, {transform_indices = @transform_1, window_bounds = array<i64: 1, 1, 1, 72>}, {transform_indices = @transform_2, window_bounds = array<i64: 1, 1, 1, 72>}, {pipeline_mode = #tpu.pipeline_mode<synchronous>, transform_indices = @transform_3, window_bounds = array<i64: 216, 128>}, {transform_indices = @transform_4, window_bounds = array<i64: 1, 1, 8, 128>}]} {
    %c0 = arith.constant 0 : index
    %c0_0 = arith.constant 0 : index
    %c0_1 = arith.constant 0 : index
    %0 = vector.load %arg2[%c0, %c0_0, %c0_1] : memref<1x16x72xf32, #tpu.memory_space<vmem>>, vector<1x16x72xf32>
    %1 = vector.shape_cast %0 : vector<1x16x72xf32> to vector<16x72xf32>
    %c0_2 = arith.constant 0 : index
    %c0_3 = arith.constant 0 : index
    %c0_4 = arith.constant 0 : index
    %c0_5 = arith.constant 0 : index
    %2 = vector.load %arg3[%c0_2, %c0_3, %c0_4, %c0_5] : memref<1x1x1x72xf32, #tpu.memory_space<vmem>>, vector<1x1x1x72xf32>
    %3 = vector.shape_cast %2 : vector<1x1x1x72xf32> to vector<1x72xf32>
    %c0_6 = arith.constant 0 : index
    %c0_7 = arith.constant 0 : index
    %c0_8 = arith.constant 0 : index
    %c0_9 = arith.constant 0 : index
    %4 = vector.load %arg4[%c0_6, %c0_7, %c0_8, %c0_9] : memref<1x1x1x72xf32, #tpu.memory_space<vmem>>, vector<1x1x1x72xf32>
    %5 = vector.shape_cast %4 : vector<1x1x1x72xf32> to vector<1x72xf32>
    %6 = tpu.concatenate %3, %1, %5 in 0 : vector<1x72xf32>, vector<16x72xf32>, vector<1x72xf32> -> vector<18x72xf32>
    %7 = vector.extract_strided_slice %6 {offsets = [0, 0], sizes = [16, 72], strides = [1, 1]} : vector<18x72xf32> to vector<16x72xf32>
    %8 = vector.extract_strided_slice %6 {offsets = [1, 0], sizes = [16, 72], strides = [1, 1]} : vector<18x72xf32> to vector<16x72xf32>
    %9 = vector.extract_strided_slice %6 {offsets = [2, 0], sizes = [16, 72], strides = [1, 1]} : vector<18x72xf32> to vector<16x72xf32>
    %10 = tpu.concatenate %7, %8, %9 in 1 : vector<16x72xf32>, vector<16x72xf32>, vector<16x72xf32> -> vector<16x216xf32>
    %c0_10 = arith.constant 0 : index
    %c0_11 = arith.constant 0 : index
    %11 = vector.load %arg5[%c0_10, %c0_11] : memref<216x128xf32, #tpu.memory_space<vmem>>, vector<216x128xf32>
    %cst = arith.constant dense<0.000000e+00> : vector<16x128xf32>
    %12 = tpu.matmul %10, %11, %cst {dimension_numbers = #tpu.dot_dimension_numbers<[1], [0], [0], [1], [0, 0, 1, 1], [], []>} : vector<16x216xf32>, vector<216x128xf32>, vector<16x128xf32> -> vector<16x128xf32>
    %cst_12 = arith.constant dense<0.000000e+00> : vector<128xf32>
    %13 = vector.multi_reduction <add>, %12, %cst_12 [0] : vector<16x128xf32> to vector<128xf32>
    %14 = vector.shape_cast %13 : vector<128xf32> to vector<1x128xf32>
    %15 = arith.mulf %12, %12 : vector<16x128xf32>
    %cst_13 = arith.constant dense<0.000000e+00> : vector<128xf32>
    %16 = vector.multi_reduction <add>, %15, %cst_13 [0] : vector<16x128xf32> to vector<128xf32>
    %17 = vector.shape_cast %16 : vector<128xf32> to vector<1x128xf32>
    %cst_14 = arith.constant 0.000000e+00 : f32
    %18 = vector.broadcast %cst_14 : f32 to vector<6x128xf32>
    %19 = tpu.concatenate %14, %17, %18 in 0 : vector<1x128xf32>, vector<1x128xf32>, vector<6x128xf32> -> vector<8x128xf32>
    %c0_15 = arith.constant 0 : index
    %c0_16 = arith.constant 0 : index
    %c0_17 = arith.constant 0 : index
    %c0_18 = arith.constant 0 : index
    %20 = vector.load %arg6[%c0_15, %c0_16, %c0_17, %c0_18] : memref<1x1x8x128xf32, #tpu.memory_space<vmem>>, vector<1x1x8x128xf32>
    %21 = vector.shape_cast %20 : vector<1x1x8x128xf32> to vector<8x128xf32>
    %22 = vector.shape_cast %19 : vector<8x128xf32> to vector<1x1x8x128xf32>
    tpu.vector_store %arg6[%c0_15, %c0_16, %c0_17, %c0_18], %22 {strides = array<i32>} : memref<1x1x8x128xf32, #tpu.memory_space<vmem>>, vector<1x1x8x128xf32>,
    return
  }
  func.func @transform_0(%arg0: i32, %arg1: i32) -> (i32, i32, i32) {
    %c0_i32 = arith.constant 0 : i32
    %c0_i32_0 = arith.constant 0 : i32
    return %arg0, %arg1, %c0_i32 : i32, i32, i32
  }
  func.func @transform_1(%arg0: i32, %arg1: i32) -> (i32, i32, i32, i32) {
    %c0_i32 = arith.constant 0 : i32
    %c0_i32_0 = arith.constant 0 : i32
    %c0_i32_1 = arith.constant 0 : i32
    return %arg0, %arg1, %c0_i32, %c0_i32_0 : i32, i32, i32, i32
  }
  func.func @transform_2(%arg0: i32, %arg1: i32) -> (i32, i32, i32, i32) {
    %c0_i32 = arith.constant 0 : i32
    %c0_i32_0 = arith.constant 0 : i32
    %c0_i32_1 = arith.constant 0 : i32
    return %arg0, %arg1, %c0_i32, %c0_i32_0 : i32, i32, i32, i32
  }
  func.func @transform_3(%arg0: i32, %arg1: i32) -> (i32, i32) {
    %c0_i32 = arith.constant 0 : i32
    %c0_i32_0 = arith.constant 0 : i32
    %c0_i32_1 = arith.constant 0 : i32
    return %c0_i32, %c0_i32_0 : i32, i32
  }
  func.func @transform_4(%arg0: i32, %arg1: i32) -> (i32, i32, i32, i32) {
    %c0_i32 = arith.constant 0 : i32
    %c0_i32_0 = arith.constant 0 : i32
    %c0_i32_1 = arith.constant 0 : i32
    return %arg0, %arg1, %c0_i32, %c0_i32_0 : i32, i32, i32, i32
  }
}

</mosaic_0001>

<llo_original>
// kernel: tpu_custom_call.1
$region0: #{tpu_custom_call.1}
  #allocation0 [shape = 'u32[]', space=smem, size = 0x4, offset = 0x4, fixed_abs, tag = 'smem constant byte address 0x4 - core index']
  #allocation1 [shape = 'u32[144,128]{1,0:T(1,128)}', space=vmem, size = 0x12000, scoped, tag = 'internal scratch']
  %s0 = inlined_call_operand.hbm [shape: f32[2,16,72], index: 0, kind: input, shape index: {}]
  %s1 = inlined_call_operand.vmem [shape: f32[2,1,1,72], index: 1, kind: input, shape index: {}]
  %s2 = inlined_call_operand.vmem [shape: f32[2,1,1,72], index: 2, kind: input, shape index: {}]
  %s3 = inlined_call_operand.hbm [shape: f32[216,128], index: 3, kind: input, shape index: {}]
  %s4 = inlined_call_operand.hbm [shape: f32[2,1,8,128], index: 4, kind: output, shape index: {}]
  %s5 = sld [smem:[#allocation0]]
  $region57: #{tpu_custom_call.1} parent=0
    _
  %s7 = ssub.s32 1, %s5
  %s8 = scalar_select 0, %s7, %s5
  $region1: #{tpu_custom_call.1} parent=0
    #allocation2 [shape = 'u8[16384]{0}', space=vmem, size = 0x4000, scoped, tag = 'input window, operand 0']
    #allocation3 [shape = 's32[2]{0}', space=sflag, size = 0x8, scoped, tag = 'scoped memory for tpu_custom_call.1']
    #allocation4 [shape = 's32[2]{0}', space=sflag, size = 0x8, scoped, tag = 'scoped memory for tpu_custom_call.1']
    #allocation5 [shape = 'u8[110592]{0}', space=vmem, size = 0x1b000, scoped, tag = 'input window, operand 3, single buffered']
    #allocation6 [shape = 's32[1]{0}', space=sflag, size = 0x4, scoped, tag = 'scoped memory for tpu_custom_call.1']
    #allocation7 [shape = 'u8[8192]{0}', space=vmem, size = 0x2000, scoped, tag = 'output window, operand 0']
    %9 = vsyncpa [#allocation3], 0
    %s10 = scalar_lea.sflag [#allocation3], 1
    %11 = vsyncpa %s10, 0
    %12 = vsyncpa [#allocation6], 0
    %13 = vsyncpa [#allocation4], 0
    %s14 = scalar_lea.sflag [#allocation4], 1
    %15 = vsyncpa %s14, 0
    loop: start=0, step=1, limit=4
    $region2: #{tpu_custom_call.1} parent=1 // loop_pre_header
      _
    $region3: #{tpu_custom_call.1} parent=1 // loop_header
      %s17 = sphi 0, %s21
      %p18 = scmp.ge.s32.totalorder %s17, 4
      %s24 = sphi 0, %s36
      %s25 = sphi 0, %s32
      %s26 = sphi 0, %s24
      %s27 = sphi 0, %s25
      %s28 = sphi 0, %s26
      %s29 = sphi 0, %s27
      %s41 = sphi 0, %s43
      %s44 = sphi 0, %s41
      %s45 = sphi 0, %s44
      %s61 = sphi 0, %s45
      %s69 = sphi 0, %s71
      %s72 = sphi 0, %s69
      %s73 = sphi 0, %s72
      %s89 = sphi 0, %s73
      %s97 = sphi 0, %s99
      %s100 = sphi 0, %s97
      %s101 = sphi 0, %s100
      %s117 = sphi 0, %s101
      %s121 = sphi 0, %s121
      %s123 = sphi 0, %s121
      %s124 = sphi 0, %s123
      %s138 = sphi 0, %s124
      %s146 = sphi 0, %s148
      %s149 = sphi 0, %s146
      %s150 = sphi 0, %s149
      %s166 = sphi 0, %s150
    $region4: #{tpu_custom_call.1} parent=1 // loop_header_branch
      %20 = sbr.rel (%p18) target = $region8
    $region5: #{tpu_custom_call.1} parent=1 // loop_body
      %s22 = ssub.s32 %s17, 1
      %s23 = ssub.s32 %s17, 2
      %s30 = sadd.s32 1, %s25
      %p31 = scmp.ge.s32.totalorder %s30, 1
      %s32 = scalar_select %p31, 0, %s30
      %s33 = sadd.s32 1, %s24
      %s34 = scalar_select %p31, %s33, %s24
      %p35 = scmp.ge.s32.totalorder %s34, 2
      %s36 = scalar_select %p35, 0, %s34
      %s37 = ssub.s32 %s24, %s36
      %s38 = ssub.s32 %s25, %s32
      %s39 = sor.u32 %s37, %s38
      %p40 = scmp.eq.s32.totalorder %s39, 0
      %s42 = sadd.s32 %s41, 1
      %s43 = scalar_select %p40, %s41, %s42
      %p46 = pneg %p40
      %p47 = scmp.eq.s32.totalorder %s17, 1
      %p48 = por %p46, %p47
      %p49 = scmp.ne.s32.totalorder %s41, %s44
      %p50 = scmp.eq.s32.totalorder %s17, 0
      %p51 = por %p49, %p50
      %p52 = scmp.ne.s32.totalorder %s41, %s44
      %p53 = scmp.eq.s32.totalorder %s22, 1
      %p54 = por %p52, %p53
      %p55 = scmp.ne.s32.totalorder %s44, %s45
      %p56 = scmp.eq.s32.totalorder %s22, 0
      %p57 = por %p55, %p56
      %p58 = scmp.ne.s32.totalorder %s44, %s45
      %p59 = scmp.eq.s32.totalorder %s23, 1
      %p60 = por %p58, %p59
      %p62 = scmp.ne.s32.totalorder %s45, %s61
      %p63 = scmp.eq.s32.totalorder %s23, 0
      %p64 = por %p62, %p63
      %s65 = ssub.s32 %s24, %s36
      %s66 = ssub.s32 %s25, %s32
      %s67 = sor.u32 %s65, %s66
      %p68 = scmp.eq.s32.totalorder %s67, 0
      %s70 = sadd.s32 %s69, 1
      %s71 = scalar_select %p68, %s69, %s70
      %p74 = pneg %p68
      %p75 = scmp.eq.s32.totalorder %s17, 1
      %p76 = por %p74, %p75
      %p77 = scmp.ne.s32.totalorder %s69, %s72
      %p78 = scmp.eq.s32.totalorder %s17, 0
      %p79 = por %p77, %p78
      %p80 = scmp.ne.s32.totalorder %s69, %s72
      %p81 = scmp.eq.s32.totalorder %s22, 1
      %p82 = por %p80, %p81
      %p83 = scmp.ne.s32.totalorder %s72, %s73
      %p84 = scmp.eq.s32.totalorder %s22, 0
      %p85 = por %p83, %p84
      %p86 = scmp.ne.s32.totalorder %s72, %s73
      %p87 = scmp.eq.s32.totalorder %s23, 1
      %p88 = por %p86, %p87
      %p90 = scmp.ne.s32.totalorder %s73, %s89
      %p91 = scmp.eq.s32.totalorder %s23, 0
      %p92 = por %p90, %p91
      %s93 = ssub.s32 %s24, %s36
      %s94 = ssub.s32 %s25, %s32
      %s95 = sor.u32 %s93, %s94
      %p96 = scmp.eq.s32.totalorder %s95, 0
      %s98 = sadd.s32 %s97, 1
      %s99 = scalar_select %p96, %s97, %s98
      %p102 = pneg %p96
      %p103 = scmp.eq.s32.totalorder %s17, 1
      %p104 = por %p102, %p103
      %p105 = scmp.ne.s32.totalorder %s97, %s100
      %p106 = scmp.eq.s32.totalorder %s17, 0
      %p107 = por %p105, %p106
      %p108 = scmp.ne.s32.totalorder %s97, %s100
      %p109 = scmp.eq.s32.totalorder %s22, 1
      %p110 = por %p108, %p109
      %p111 = scmp.ne.s32.totalorder %s100, %s101
      %p112 = scmp.eq.s32.totalorder %s22, 0
      %p113 = por %p111, %p112
      %p114 = scmp.ne.s32.totalorder %s100, %s101
      %p115 = scmp.eq.s32.totalorder %s23, 1
      %p116 = por %p114, %p115
      %p118 = scmp.ne.s32.totalorder %s101, %s117
      %p119 = scmp.eq.s32.totalorder %s23, 0
      %p120 = por %p118, %p119
      %s122 = sadd.s32 %s121, 1
      %p125 = scmp.eq.s32.totalorder %s17, 1
      %p126 = scmp.ne.s32.totalorder %s121, %s123
      %p127 = scmp.eq.s32.totalorder %s17, 0
      %p128 = por %p126, %p127
      %p129 = scmp.ne.s32.totalorder %s121, %s123
      %p130 = scmp.eq.s32.totalorder %s22, 1
      %p131 = por %p129, %p130
      %p132 = scmp.ne.s32.totalorder %s123, %s124
      %p133 = scmp.eq.s32.totalorder %s22, 0
      %p134 = por %p132, %p133
      %p135 = scmp.ne.s32.totalorder %s123, %s124
      %p136 = scmp.eq.s32.totalorder %s23, 1
      %p137 = por %p135, %p136
      %p139 = scmp.ne.s32.totalorder %s124, %s138
      %p140 = scmp.eq.s32.totalorder %s23, 0
      %p141 = por %p139, %p140
      %s142 = ssub.s32 %s24, %s36
      %s143 = ssub.s32 %s25, %s32
      %s144 = sor.u32 %s142, %s143
      %p145 = scmp.eq.s32.totalorder %s144, 0
      %s147 = sadd.s32 %s146, 1
      %s148 = scalar_select %p145, %s146, %s147
      %p151 = pneg %p145
      %p152 = scmp.eq.s32.totalorder %s17, 1
      %p153 = por %p151, %p152
      %p154 = scmp.ne.s32.totalorder %s146, %s149
      %p155 = scmp.eq.s32.totalorder %s17, 0
      %p156 = por %p154, %p155
      %p157 = scmp.ne.s32.totalorder %s146, %s149
      %p158 = scmp.eq.s32.totalorder %s22, 1
      %p159 = por %p157, %p158
      %p160 = scmp.ne.s32.totalorder %s149, %s150
      %p161 = scmp.eq.s32.totalorder %s22, 0
      %p162 = por %p160, %p161
      %p163 = scmp.ne.s32.totalorder %s149, %s150
      %p164 = scmp.eq.s32.totalorder %s23, 1
      %p165 = por %p163, %p164
      %p167 = scmp.ne.s32.totalorder %s150, %s166
      %p168 = scmp.eq.s32.totalorder %s23, 0
      %p169 = por %p167, %p168
      %p170 = scmp.le.s32.totalorder 1, %s17
      %p171 = scmp.lt.s32.totalorder %s17, 3
      %p172 = pnand %p170, %p171
      %p173 = pneg %p172
      // Predicated region
      $region9: #{tpu_custom_call.1} parent=5 // pred_check
        _
      $region10: #{tpu_custom_call.1} parent=5 // pred_check_branch
        %175 = sbr.rel (%p172) target = $region12
      $region11: #{tpu_custom_call.1} parent=5 // pred_region
        %s176 = ssub.s32 %s17, 1
        // Predicated region
        $region13: #{tpu_custom_call.1} parent=11 // pred_check
          %p177 = pneg %p134
        $region14: #{tpu_custom_call.1} parent=11 // pred_check_branch
          %179 = sbr.rel (%p177) target = $region16
        $region15: #{tpu_custom_call.1} parent=11 // pred_region
          %s181 = ssub.s32 3456, 3456
          %182 = vsyncadd [#allocation6], %s181
          %s183 = sshll.u32 [#allocation5], 4
          %s184 = int_to_ptr.vmem [resolvable:$true] %s183
          %189 = dma.hbm_to_vmem [thread:$0]  %s3, 3456, %s184, [#allocation6], 128, 128, 8
        $region16: #{tpu_custom_call.1} parent=11 // pred_fallthru
          _
      $region12: #{tpu_custom_call.1} parent=5 // pred_fallthru
        _
      %p190 = scmp.lt.s32.totalorder %s17, 2
      // Predicated region
      $region17: #{tpu_custom_call.1} parent=5 // pred_check
        %p191 = pneg %p190
      $region18: #{tpu_custom_call.1} parent=5 // pred_check_branch
        %193 = sbr.rel (%p191) target = $region20
      $region19: #{tpu_custom_call.1} parent=5 // pred_region
        // Predicated region
        $region21: #{tpu_custom_call.1} parent=19 // pred_check
          %p194 = pneg %p51
        $region22: #{tpu_custom_call.1} parent=19 // pred_check_branch
          %196 = sbr.rel (%p194) target = $region24
        $region23: #{tpu_custom_call.1} parent=19 // pred_region
          %s197 = sand.u32 %s41, 1
          %s198 = scalar_lea.sflag [#allocation3], %s197
          %s199 = sand.u32 %s41, 1
          %s200 = smul.addr %s199, 16
          %s201 = scalar_lea.vmem [#allocation2], %s200
          %s202 = smul.u32 2, %s25
          %s204 = ssub.s32 256, 256
          %205 = vsyncadd %s198, %s204
          %s206 = smul.addr %s24, 2
          %s207 = sadd.s32 %s202, %s206
          %s208 = smul.addr %s207, 128
          %s209 = scalar_lea.hbm %s0, %s208
          %s210 = sshll.u32 %s201, 4
          %s211 = int_to_ptr.vmem [resolvable:$true] %s210
          %216 = dma.hbm_to_vmem [thread:$0]  %s209, 256, %s211, %s198, 128, 128, 8
        $region24: #{tpu_custom_call.1} parent=19 // pred_fallthru
          _
        // Predicated region
        $region25: #{tpu_custom_call.1} parent=19 // pred_check
          %p217 = pneg %p79
        $region26: #{tpu_custom_call.1} parent=19 // pred_check_branch
          %219 = sbr.rel (%p217) target = $region28
        $region27: #{tpu_custom_call.1} parent=19 // pred_region
          %p220 = scmp.lt.s32.totalorder %s24, 1
          %s221 = scalar_select %p220, %s24, 1
          %p222 = scmp.lt.s32.totalorder %s25, 0
          %s223 = scalar_select %p222, %s25, 0
          %s224 = sadd.s32 %s223, %s221
          %s225 = scalar_lea.vmem %s1, %s224
        $region28: #{tpu_custom_call.1} parent=19 // pred_fallthru
          _
        // Predicated region
        $region29: #{tpu_custom_call.1} parent=19 // pred_check
          %p226 = pneg %p107
        $region30: #{tpu_custom_call.1} parent=19 // pred_check_branch
          %228 = sbr.rel (%p226) target = $region32
        $region31: #{tpu_custom_call.1} parent=19 // pred_region
          %p229 = scmp.lt.s32.totalorder %s24, 1
          %s230 = scalar_select %p229, %s24, 1
          %p231 = scmp.lt.s32.totalorder %s25, 0
          %s232 = scalar_select %p231, %s25, 0
          %s233 = sadd.s32 %s232, %s230
          %s234 = scalar_lea.vmem %s2, %s233
        $region32: #{tpu_custom_call.1} parent=19 // pred_fallthru
          _
      $region20: #{tpu_custom_call.1} parent=5 // pred_fallthru
        _
      %p235 = scmp.le.s32.totalorder 1, %s17
      %p236 = scmp.lt.s32.totalorder %s17, 3
      %p237 = pnand %p235, %p236
      %p238 = pneg %p237
      // Predicated region
      $region33: #{tpu_custom_call.1} parent=5 // pred_check
        _
      $region34: #{tpu_custom_call.1} parent=5 // pred_check_branch
        %240 = sbr.rel (%p237) target = $region36
      $region35: #{tpu_custom_call.1} parent=5 // pred_region
        %s241 = ssub.s32 %s17, 1
        %s242 = sand.u32 %s44, 1
        %s243 = scalar_lea.sflag [#allocation3], %s242
        %s244 = sand.u32 %s44, 1
        %s245 = smul.addr %s244, 16
        %s246 = scalar_lea.vmem [#allocation2], %s245
        // Predicated region
        $region37: #{tpu_custom_call.1} parent=35 // pred_check
          %p247 = pneg %p57
        $region38: #{tpu_custom_call.1} parent=35 // pred_check_branch
          %249 = sbr.rel (%p247) target = $region40
        $region39: #{tpu_custom_call.1} parent=35 // pred_region
          %250 = dma.done %s243, 256
        $region40: #{tpu_custom_call.1} parent=35 // pred_fallthru
          _
        // Predicated region
        $region41: #{tpu_custom_call.1} parent=35 // pred_check
          %p251 = pneg %p134
        $region42: #{tpu_custom_call.1} parent=35 // pred_check_branch
          %253 = sbr.rel (%p251) target = $region44
        $region43: #{tpu_custom_call.1} parent=35 // pred_region
          %254 = dma.done [#allocation6], 3456
        $region44: #{tpu_custom_call.1} parent=35 // pred_fallthru
          _
        %s255 = sand.u32 %s44, 1
        %s256 = scalar_lea.sflag [#allocation3], %s255
        %s257 = sand.u32 %s44, 1
        %s258 = smul.addr %s257, 16
        %s259 = scalar_lea.vmem [#allocation2], %s258
        %p260 = pneg %p57
        %p261 = pneg %p54
        %p262 = scmp.lt.s32.totalorder %s26, 1
        %s263 = scalar_select %p262, %s26, 1
        %p264 = scmp.lt.s32.totalorder %s27, 0
        %s265 = scalar_select %p264, %s27, 0
        %s266 = sadd.s32 %s265, %s263
        %s267 = scalar_lea.vmem %s1, %s266
        %p268 = pneg %p85
        %p269 = pneg %p82
        %p270 = scmp.lt.s32.totalorder %s26, 1
        %s271 = scalar_select %p270, %s26, 1
        %p272 = scmp.lt.s32.totalorder %s27, 0
        %s273 = scalar_select %p272, %s27, 0
        %s274 = sadd.s32 %s273, %s271
        %s275 = scalar_lea.vmem %s2, %s274
        %p276 = pneg %p113
        %p277 = pneg %p110
        %p278 = pneg %p134
        %p279 = pneg %p131
        %p280 = pneg %p162
        %p281 = pneg %p159
        %s282 = sand.u32 %s149, 1
        %s283 = scalar_lea.sflag [#allocation4], %s282
        %s284 = sand.u32 %s149, 1
        %s285 = smul.addr %s284, 8
        %s286 = scalar_lea.vmem [#allocation7], %s285
        %s287 = smul.u32 2, %s27
        %p288 = scmp.lt.s32.totalorder %s26, 1
        %s289 = scalar_select %p288, %s26, 1
        %p290 = scmp.lt.s32.totalorder %s27, 0
        %s291 = scalar_select %p290, %s27, 0
        %s292 = sadd.s32 %s291, %s289
        %s293 = scalar_lea.vmem %s1, %s292
        %p294 = scmp.lt.s32.totalorder %s26, 1
        %s295 = scalar_select %p294, %s26, 1
        %p296 = scmp.lt.s32.totalorder %s27, 0
        %s297 = scalar_select %p296, %s27, 0
        %s298 = sadd.s32 %s297, %s295
        %s299 = scalar_lea.vmem %s2, %s298
        %v300 = vld [vmem:[%s246] sm:$0xff]
        %v301 = vld [vmem:[%s246 + $0x8] sm:$0xff]
        %v302 = vld [vmem:[%s293] sm:$0x1]
        %v303 = vld [vmem:[%s299] sm:$0x1]
        %vm306 = vcmask 1040384
        %v307 = vrot.slane %v300, 7
        %v308 = vrot.slane %v301, 7
        %v309 = vsel %vm306, %v307, %v308
        %v314 = vlaneseq
        %v315 = vshrl.u32 %v314, 7
        %v316 = vsub.s32 0, %v315
        %v317 = vrot.slane %v303, %v316
        %v319 = vsel %vm306, %v302, %v307
        %v320 = vsel %vm306, %v308, %v317
        %vm323 = vcmask 1046528
        %v324 = vrot.slane %v319, 1
        %v325 = vrot.slane %v309, 1
        %v326 = vsel %vm323, %v324, %v325
        %v327 = vrot.slane %v320, 1
        %v328 = vsel %vm323, %v325, %v327
        %329 = vrot.lane.b32.xlu0 %v326, 72
        %v330 = vpop.permute.xlu0 %329
        %331 = vrot.lane.b32.xlu0 %v328, 72
        %v332 = vpop.permute.xlu0 %331
        %vm335 = vcmask 1045504
        %v336 = vrot.slane %v319, 2
        %v337 = vrot.slane %v309, 2
        %v338 = vsel %vm335, %v336, %v337
        %v339 = vrot.slane %v320, 2
        %v340 = vsel %vm335, %v337, %v339
        %341 = vrot.lane.b32.xlu0 %v338, 16
        %v342 = vpop.permute.xlu0 %341
        %343 = vrot.lane.b32.xlu0 %v340, 16
        %v344 = vpop.permute.xlu0 %343
        %vm347 = vcmask 588800
        %v348 = vsel %vm347, %v319, %v330
        %v349 = vsel %vm347, %v309, %v332
        %vm350 = vcmask 130048
        %v351 = vsel %vm350, %v330, %v342
        %v352 = vsel %vm350, %v332, %v344
        %v353 = vld [vmem:[#allocation5] sm:$0xff]
        %v354 = vld [vmem:[#allocation5 + $0x8] sm:$0xff]
        %v355 = vld [vmem:[#allocation5 + $0x10] sm:$0xff]
        %v356 = vld [vmem:[#allocation5 + $0x18] sm:$0xff]
        %v357 = vld [vmem:[#allocation5 + $0x20] sm:$0xff]
        %v358 = vld [vmem:[#allocation5 + $0x28] sm:$0xff]
        %v359 = vld [vmem:[#allocation5 + $0x30] sm:$0xff]
        %v360 = vld [vmem:[#allocation5 + $0x38] sm:$0xff]
        %v361 = vld [vmem:[#allocation5 + $0x40] sm:$0xff]
        %v362 = vld [vmem:[#allocation5 + $0x48] sm:$0xff]
        %v363 = vld [vmem:[#allocation5 + $0x50] sm:$0xff]
        %v364 = vld [vmem:[#allocation5 + $0x58] sm:$0xff]
        %v365 = vld [vmem:[#allocation5 + $0x60] sm:$0xff]
        %v366 = vld [vmem:[#allocation5 + $0x68] sm:$0xff]
        %v367 = vld [vmem:[#allocation5 + $0x70] sm:$0xff]
        %v368 = vld [vmem:[#allocation5 + $0x78] sm:$0xff]
        %v369 = vld [vmem:[#allocation5 + $0x80] sm:$0xff]
        %v370 = vld [vmem:[#allocation5 + $0x88] sm:$0xff]
        %v371 = vld [vmem:[#allocation5 + $0x90] sm:$0xff]
        %v372 = vld [vmem:[#allocation5 + $0x98] sm:$0xff]
        %v373 = vld [vmem:[#allocation5 + $0xa0] sm:$0xff]
        %v374 = vld [vmem:[#allocation5 + $0xa8] sm:$0xff]
        %v375 = vld [vmem:[#allocation5 + $0xb0] sm:$0xff]
        %v376 = vld [vmem:[#allocation5 + $0xb8] sm:$0xff]
        %v377 = vld [vmem:[#allocation5 + $0xc0] sm:$0xff]
        %v378 = vld [vmem:[#allocation5 + $0xc8] sm:$0xff]
        %v379 = vld [vmem:[#allocation5 + $0xd0] sm:$0xff]
        %vm380 = vcmask 719872
        %v382 = vsel %vm380, %v351, 0
        %v385 = vsel %vm380, %v352, 0
        %387 = vmatprep.subr.mxu0 0.0
        %388 = vmatpush1.msra.mxu0 %v353
        %389 = vmatprep.subr.mxu0 0.0
        %390 = vmatpush1.msra.mxu0 %v354
        %391 = vmatprep.subr.mxu0 0.0
        %392 = vmatpush1.msra.mxu0 %v355
        %393 = vmatprep.subr.mxu0 0.0
        %394 = vmatpush1.msra.mxu0 %v356
        %395 = vmatprep.subr.mxu0 0.0
        %396 = vmatpush1.msra.mxu0 %v357
        %397 = vmatprep.subr.mxu0 0.0
        %398 = vmatpush1.msra.mxu0 %v358
        %399 = vmatprep.subr.mxu0 0.0
        %400 = vmatpush1.msra.mxu0 %v359
        %401 = vmatprep.subr.mxu0 0.0
        %402 = vmatpush1.msra.mxu0 %v360
        %403 = vmatprep.subr.mxu0 0.0
        %404 = vmatpush1.msra.mxu0 %v361
        %405 = vmatprep.subr.mxu0 0.0
        %406 = vmatpush1.msra.mxu0 %v362
        %407 = vmatprep.subr.mxu0 0.0
        %408 = vmatpush1.msra.mxu0 %v363
        %409 = vmatprep.subr.mxu0 0.0
        %410 = vmatpush1.msra.mxu0 %v364
        %411 = vmatprep.subr.mxu0 0.0
        %412 = vmatpush1.msra.mxu0 %v365
        %413 = vmatprep.subr.mxu0 0.0
        %414 = vmatpush1.msra.mxu0 %v366
        %415 = vmatprep.subr.mxu0 0.0
        %416 = vmatpush1.msra.mxu0 %v367
        %417 = vmatprep.subr.mxu0 0.0
        %418 = vmatpush1.msra.mxu0 %v368
        %419 = vmatprep.subr.mxu0 0.0
        %420 = vmatpush1.msra.mxu0 %v369
        %421 = vmatprep.subr.mxu0 0.0
        %422 = vmatpush1.msra.mxu0 %v370
        %423 = vmatprep.subr.mxu0 0.0
        %424 = vmatpush1.msra.mxu0 %v371
        %425 = vmatprep.subr.mxu0 0.0
        %426 = vmatpush1.msra.mxu0 %v372
        %427 = vmatprep.subr.mxu0 0.0
        %428 = vmatpush1.msra.mxu0 %v373
        %429 = vmatprep.subr.mxu0 0.0
        %430 = vmatpush1.msra.mxu0 %v374
        %431 = vmatprep.subr.mxu0 0.0
        %432 = vmatpush1.msra.mxu0 %v375
        %433 = vmatprep.subr.mxu0 0.0
        %434 = vmatpush1.msra.mxu0 %v376
        %435 = vmatprep.subr.mxu0 0.0
        %436 = vmatpush1.msra.mxu0 %v377
        %437 = vmatprep.subr.mxu0 0.0
        %438 = vmatpush1.msra.mxu0 %v378
        %439 = vmatprep.subr.mxu0 0.0
        %440 = vmatpush1.msra.mxu0 %v379
        %441 = vmatprep.subr.mxu0 0.0
        %442 = vmatpush1.msra.mxu0 0.0
        %443 = vmatprep.subr.mxu0 0.0
        %444 = vmatpush1.msra.mxu0 0.0
        %445 = vmatprep.subr.mxu0 0.0
        %446 = vmatpush1.msra.mxu0 0.0
        %447 = vmatprep.subr.mxu0 0.0
        %448 = vmatpush1.msra.mxu0 0.0
        %449 = vmatprep.subr.mxu0 0.0
        %450 = vmatpush1.msra.mxu0 0.0
        %451 = vmatprep.mubr.f32.mxu0 %v382
        %452 = vmatmul.mubr.f32.gmra.mrb[0].mxu0 %v348
        %v453 = vpop.f32.mrb[0].mxu0
        %v454 = vadd.f32 0.0, %v453
        %v455 = vpop.f32.mrb[0].mxu0
        %456 = vmatprep.mubr.f32.mxu0 %v385
        %457 = vmatmul.mubr.f32.gmra.mrb[0].mxu0 %v349
        %v458 = vpop.f32.mrb[0].mxu0
        %v459 = vadd.f32 0.0, %v458
        %v460 = vpop.f32.mrb[0].mxu0
        %461 = vdwg.mxu0
        %v462 = vadd.f32 %v454, %v459
        %v463 = vrot.slane %v462, 4
        %v464 = vadd.f32 %v462, %v463
        %v465 = vrot.slane %v464, 2
        %v466 = vadd.f32 %v464, %v465
        %v467 = vrot.slane %v466, 1
        %v468 = vadd.f32 %v466, %v467
        %v469 = vmul.f32 %v454, %v454
        %v470 = vmul.f32 %v459, %v459
        %v471 = vadd.f32 %v469, %v470
        %v472 = vrot.slane %v471, 4
        %v473 = vadd.f32 %v471, %v472
        %v474 = vrot.slane %v473, 2
        %v475 = vadd.f32 %v473, %v474
        %v476 = vrot.slane %v475, 1
        %v477 = vadd.f32 %v475, %v476
        %v478 = vsel %vm306, %v468, %v477
        %vm479 = vcmask 1041408
        %v480 = vsel %vm479, %v478, 0.0
        %481 = vst [vmem:[%s286] sm:$0xff] %v480
        %s482 = sand.u32 %s149, 1
        %s483 = scalar_lea.sflag [#allocation4], %s482
        %s484 = sand.u32 %s149, 1
        %s485 = smul.addr %s484, 8
        %s486 = scalar_lea.vmem [#allocation7], %s485
        // Predicated region
        $region45: #{tpu_custom_call.1} parent=35 // pred_check
          %p487 = pneg %p159
        $region46: #{tpu_custom_call.1} parent=35 // pred_check_branch
          %489 = sbr.rel (%p487) target = $region48
        $region47: #{tpu_custom_call.1} parent=35 // pred_region
          %s491 = ssub.s32 128, 128
          %492 = vsyncadd %s483, %s491
          %s493 = sadd.s32 %s27, %s26
          %s494 = smul.addr %s493, 128
          %s495 = scalar_lea.hbm %s4, %s494
          %s497 = sshll.u32 %s486, 4
          %s498 = int_to_ptr.vmem [resolvable:$true] %s497
          %500 = dma.vmem_to_hbm [thread:$0]  %s498, 128, %s495, %s483
        $region48: #{tpu_custom_call.1} parent=35 // pred_fallthru
          _
      $region36: #{tpu_custom_call.1} parent=5 // pred_fallthru
        _
      %p501 = scmp.le.s32.totalorder 2, %s17
      // Predicated region
      $region49: #{tpu_custom_call.1} parent=5 // pred_check
        %p502 = pneg %p501
      $region50: #{tpu_custom_call.1} parent=5 // pred_check_branch
        %504 = sbr.rel (%p502) target = $region52
      $region51: #{tpu_custom_call.1} parent=5 // pred_region
        %s505 = ssub.s32 %s17, 2
        // Predicated region
        $region53: #{tpu_custom_call.1} parent=51 // pred_check
          %p506 = pneg %p165
        $region54: #{tpu_custom_call.1} parent=51 // pred_check_branch
          %508 = sbr.rel (%p506) target = $region56
        $region55: #{tpu_custom_call.1} parent=51 // pred_region
          %s509 = sand.u32 %s150, 1
          %s510 = scalar_lea.sflag [#allocation4], %s509
          %s511 = sand.u32 %s150, 1
          %s512 = smul.addr %s511, 8
          %s513 = scalar_lea.vmem [#allocation7], %s512
          %514 = dma.done %s510, 128
        $region56: #{tpu_custom_call.1} parent=51 // pred_fallthru
          _
      $region52: #{tpu_custom_call.1} parent=5 // pred_fallthru
        _
    $region6: #{tpu_custom_call.1} parent=1 // loop_footer
      %s21 = sadd.s32 1, %s17
    $region7: #{tpu_custom_call.1} parent=1 // loop_footer_branch
      %16 = sbr.rel target = $region3
    $region8: #{tpu_custom_call.1} parent=1 // loop_exit
      _
    %515 = vsyncpa [#allocation3], 1
    %s516 = scalar_lea.sflag [#allocation3], 1
    %517 = vsyncpa %s516, 1
    %518 = vsyncpa [#allocation6], 1
    %519 = vsyncpa [#allocation4], 1
    %s520 = scalar_lea.sflag [#allocation4], 1
    %521 = vsyncpa %s520, 1

</llo_original>
